<compile_context>
chip_gen: v7x
topology: tpu7x:2x2x1
jax: 0.10.0
libtpu: 0.0.40
codegen_flags: <defaults>
</compile_context>

<pallas_src>
import functools

import jax
import jax.numpy as jnp
from jax import lax
from jax.experimental import pallas as pl
from jax.experimental.pallas import tpu as pltpu


def _round_up(n, m):
    return ((n + m - 1) // m) * m


def _vmem_capacity_bytes():
    """Physical per-core VMEM, with a conservative (v7x-sized) fallback."""
    try:
        info = pltpu.get_tpu_info()
        cap = getattr(info, "vmem_capacity_bytes", None)
        if cap:
            return int(cap)
    except Exception:
        pass
    return 64 * 1024 * 1024


def _has_two_tensorcores():
    """True only on chips with 2 TensorCores per chip (v7x)."""
    try:
        return "v7" in jax.devices()[0].device_kind.lower()
    except Exception:
        return False


# ---------------------------------------------------------------------------
# Fused kernel: per-chunk input projection (one big MXU matmul, off the serial
# chain) + sequential recurrence over the chunk's timesteps.
#   grid = (batch_tiles ["parallel"], time_chunks ["arbitrary"])
# ---------------------------------------------------------------------------
def fused_rnn_kernel(x_ref, wxh_ref, whh_ref, b_ref, y_ref, h_ref, xp_ref,
                     *, matmul_dtype):
    """One grid step = one (batch_tile, time_chunk).

    x_ref   : (t_chunk, b_tile, ip)   matmul_dtype
    wxh_ref : (ip, hp)                matmul_dtype   (resident, Buffered(1))
    whh_ref : (hp, hp)                matmul_dtype   (resident, Buffered(1))
    b_ref   : (1, hp)                 f32            (resident, Buffered(1))
    y_ref   : (t_chunk, b_tile, hp)   f32
    h_ref   : (b_tile, hp)            f32  resident carry across time chunks
    xp_ref  : (t_chunk * b_tile, hp)  f32  VMEM scratch (chunk input projection)
    """
    chunk = pl.program_id(1)
    t_chunk, b_tile, ip = x_ref.shape

    @pl.when(chunk == 0)
    def _():
        h_ref[...] = jnp.zeros_like(h_ref)

    # --- chunk-level input projection: one large MXU matmul ------------------
    x2d = x_ref[...].reshape(t_chunk * b_tile, ip)     # b_tile % 8 == 0 -> clean
    xp_ref[...] = (
        jnp.dot(x2d, wxh_ref[...], preferred_element_type=jnp.float32)
        + b_ref[...]
    )

    # --- sequential recurrence: only h @ W_hh + tanh is on the serial chain --
    w_hh = whh_ref[...]                                 # resident weight tile

    def step(i, h_prev):
        row = pl.multiple_of(i * b_tile, 8)
        pre = xp_ref[pl.ds(row, b_tile), :] + jnp.dot(
            h_prev.astype(matmul_dtype), w_hh,
            preferred_element_type=jnp.float32,
        )
        h_new = jnp.tanh(pre)            # f32 elementwise (v5e has no bf16 VPU/EUP)
        y_ref[i] = h_new                 # lane-dense (hidden padded to 128)
        return h_new

    h_ref[...] = lax.fori_loop(0, t_chunk, step, h_ref[...],
                               unroll=min(t_chunk, 8))


def simple_rnn_forward(x, w_xh, w_hh, b_h, *,
                       matmul_dtype=jnp.bfloat16, t_chunk=None, b_tile=None):
    """x: (seq, batch, input_dim) f32 -> (h: (batch, hidden), y: (seq, batch, hidden))."""
    seq, batch, input_dim = x.shape
    hidden_dim = w_hh.shape[0]
    b_h = b_h.reshape(1, -1)

    # Lane-dense padding targets. Padded hidden lanes stay exactly 0 (zero bias,
    # zero W_xh/W_hh rows & columns, tanh(0)=0); padded batch rows / padded time
    # steps never mix with real ones and are sliced off at the end.
    ip = _round_up(input_dim, 128)
    hp = _round_up(hidden_dim, 128)
    bp = _round_up(batch, 8)

    # ---- VMEM budget (generation aware) ----
    phys = _vmem_capacity_bytes()
    vmem_limit = min(int(phys * 0.8), 100 * 1024 * 1024)    # ~51 MiB v7x, ~100 MiB v5e/v6e
    sizing_budget = max(vmem_limit - 4 * 1024 * 1024, 8 * 1024 * 1024)

    # ---- batch tiling: only split across cores on v7x with a big batch ----
    if b_tile is None:
        b_tile = bp
        if _has_two_tensorcores() and bp >= 256 and (bp // 2) % 8 == 0:
            b_tile = bp // 2

    # ---- time chunk from the VMEM budget ----
    mm_bytes = jnp.dtype(matmul_dtype).itemsize
    fixed = (ip * hp + hp * hp) * mm_bytes + hp * 4 + 2 * b_tile * hp * 4
    # per-timestep residency: x chunk (2 pipeline bufs) + y chunk (2 bufs) + xp scratch
    per_step = b_tile * (2 * ip * mm_bytes + 2 * hp * 4 + hp * 4)
    if t_chunk is None:
        t_chunk = int(max(1, min(seq, 64, (sizing_budget - fixed) // per_step)))
    seq_p = _round_up(seq, t_chunk)

    # ---- padding (skipped when already aligned) + bf16 cast of MXU operands ----
    if (seq_p, bp, ip) == x.shape:
        x_p = x
    else:
        x_p = jnp.zeros((seq_p, bp, ip), x.dtype).at[:seq, :batch, :input_dim].set(x)
    if (ip, hp) == w_xh.shape:
        wxh_p = w_xh
    else:
        wxh_p = jnp.zeros((ip, hp), w_xh.dtype).at[:input_dim, :hidden_dim].set(w_xh)
    if (hp, hp) == w_hh.shape:
        whh_p = w_hh
    else:
        whh_p = jnp.zeros((hp, hp), w_hh.dtype).at[:hidden_dim, :hidden_dim].set(w_hh)
    if (1, hp) == b_h.shape:
        b_p = b_h.astype(jnp.float32)
    else:
        b_p = jnp.zeros((1, hp), jnp.float32).at[:, :hidden_dim].set(b_h)

    x_mm = x_p.astype(matmul_dtype)
    wxh_mm = wxh_p.astype(matmul_dtype)
    whh_mm = whh_p.astype(matmul_dtype)

    grid = (bp // b_tile, seq_p // t_chunk)
    kernel = functools.partial(fused_rnn_kernel, matmul_dtype=matmul_dtype)

    y_p, h_p = pl.pallas_call(
        kernel,
        grid_spec=pltpu.PrefetchScalarGridSpec(
            num_scalar_prefetch=0,
            grid=grid,
            in_specs=[
                pl.BlockSpec((t_chunk, b_tile, ip), lambda b, c: (c, b, 0)),
                pl.BlockSpec((ip, hp), lambda b, c: (0, 0),
                             pipeline_mode=pl.Buffered(1)),
                pl.BlockSpec((hp, hp), lambda b, c: (0, 0),
                             pipeline_mode=pl.Buffered(1)),
                pl.BlockSpec((1, hp), lambda b, c: (0, 0),
                             pipeline_mode=pl.Buffered(1)),
            ],
            out_specs=[
                pl.BlockSpec((t_chunk, b_tile, hp), lambda b, c: (c, b, 0)),
                pl.BlockSpec((b_tile, hp), lambda b, c: (b, 0)),
            ],
            scratch_shapes=[pltpu.VMEM((t_chunk * b_tile, hp), jnp.float32)],
        ),
        out_shape=(
            jax.ShapeDtypeStruct((seq_p, bp, hp), jnp.float32),
            jax.ShapeDtypeStruct((bp, hp), jnp.float32),
        ),
        compiler_params=pltpu.CompilerParams(
            dimension_semantics=("parallel", "arbitrary"),
            vmem_limit_bytes=vmem_limit,
        ),
    )(x_mm, wxh_mm, whh_mm, b_p)

    # If seq was padded, the kernel's final-h output includes padded steps; take
    # the real last timestep from y instead (exactly equivalent otherwise).
    h_out = (y_p[seq - 1] if seq_p != seq else h_p)[:batch, :hidden_dim]
    y_out = y_p[:seq, :batch, :hidden_dim]
    return h_out, y_out


def simple_rnn_reference(x, w_xh, w_hh, b_h):
    def step(h, x_t):
        h_new = jnp.tanh(x_t @ w_xh + h @ w_hh + b_h)
        return h_new, h_new

    h0 = jnp.zeros((x.shape[1], w_hh.shape[0]), jnp.float32)
    return lax.scan(step, h0, x)


if __name__ == "__main__":
    seq, batch, input_dim, hidden_dim = 8, 8, 16, 32

    key = jax.random.PRNGKey(0)
    k_x, k_wxh, k_whh, k_b = jax.random.split(key, 4)

    x = jax.random.normal(k_x, (seq, batch, input_dim), dtype=jnp.float32)
    w_xh = jax.random.normal(k_wxh, (input_dim, hidden_dim), dtype=jnp.float32) * 0.1
    w_hh = jax.random.normal(k_whh, (hidden_dim, hidden_dim), dtype=jnp.float32) * 0.1
    b_h = jax.random.normal(k_b, (1, hidden_dim), dtype=jnp.float32) * 0.1

    h_expected, y_expected = simple_rnn_reference(x, w_xh, w_hh, b_h)

    # f32 matmul path (exact check)
    h32, y32 = simple_rnn_forward(x, w_xh, w_hh, b_h, matmul_dtype=jnp.float32)
    jax.block_until_ready((h32, y32))
    assert jnp.allclose(h32, h_expected, atol=1e-5, rtol=1e-5), "final hidden mismatch (f32)"
    assert jnp.allclose(y32, y_expected, atol=1e-5, rtol=1e-5), "sequence outputs mismatch (f32)"

    # default path: bf16 MXU operands on all generations, f32 accumulation/carry/tanh
    h16, y16 = simple_rnn_forward(x, w_xh, w_hh, b_h)
    jax.block_until_ready((h16, y16))
    assert jnp.allclose(h16, h_expected, atol=5e-2, rtol=5e-2), "final hidden mismatch (bf16)"
    assert jnp.allclose(y16, y_expected, atol=5e-2, rtol=5e-2), "sequence outputs mismatch (bf16)"

    print("KERNEL_OK")
</pallas_src>

<mosaic_0001>
module attributes {stable_mosaic.version = 11 : i64} {
  func.func @fused_rnn_kernel(%arg0: i32, %arg1: i32, %arg2: memref<8x8x128xf32, #tpu.memory_space<vmem>>, %arg3: memref<128x128xf32, #tpu.memory_space<vmem>>, %arg4: memref<128x128xf32, #tpu.memory_space<vmem>>, %arg5: memref<1x128xf32, #tpu.memory_space<vmem>>, %arg6: memref<8x8x128xf32, #tpu.memory_space<vmem>>, %arg7: memref<8x128xf32, #tpu.memory_space<vmem>>, %arg8: memref<64x128xf32, #tpu.memory_space<vmem>>) attributes {dimension_semantics = [#tpu.dimension_semantics<parallel>, #tpu.dimension_semantics<arbitrary>], iteration_bounds = array<i64: 1, 1>, scalar_prefetch = 0 : i64, scratch_operands = 1 : i64, tpu.core_type = #tpu.core_type<tc>, window_params = [{transform_indices = @transform_0, window_bounds = array<i64: 8, 8, 128>}, {pipeline_mode = #tpu.pipeline_mode<synchronous>, transform_indices = @transform_1, window_bounds = array<i64: 128, 128>}, {pipeline_mode = #tpu.pipeline_mode<synchronous>, transform_indices = @transform_2, window_bounds = array<i64: 128, 128>}, {pipeline_mode = #tpu.pipeline_mode<synchronous>, transform_indices = @transform_3, window_bounds = array<i64: 1, 128>}, {transform_indices = @transform_4, window_bounds = array<i64: 8, 8, 128>}, {transform_indices = @transform_5, window_bounds = array<i64: 8, 128>}]} {
    %c0_i32 = arith.constant 0 : i32
    %0 = arith.cmpi eq, %arg1, %c0_i32 : i32
    %1 = arith.extui %0 : i1 to i32
    %c0_i32_0 = arith.constant 0 : i32
    %2 = arith.cmpi ne, %1, %c0_i32_0 : i32
    scf.if %2 {
      %cst_56 = arith.constant 0.000000e+00 : f32
      %102 = vector.broadcast %cst_56 : f32 to vector<8x128xf32>
      %c0_57 = arith.constant 0 : index
      %c0_58 = arith.constant 0 : index
      %103 = vector.load %arg7[%c0_57, %c0_58] : memref<8x128xf32, #tpu.memory_space<vmem>>, vector<8x128xf32>
      tpu.vector_store %arg7[%c0_57, %c0_58], %102 {strides = array<i32>} : memref<8x128xf32, #tpu.memory_space<vmem>>, vector<8x128xf32>,
    } else {
    }
    %c0 = arith.constant 0 : index
    %c0_1 = arith.constant 0 : index
    %c0_2 = arith.constant 0 : index
    %3 = vector.load %arg2[%c0, %c0_1, %c0_2] : memref<8x8x128xf32, #tpu.memory_space<vmem>>, vector<8x8x128xf32>
    %4 = vector.shape_cast %3 : vector<8x8x128xf32> to vector<64x128xf32>
    %c0_3 = arith.constant 0 : index
    %c0_4 = arith.constant 0 : index
    %5 = vector.load %arg3[%c0_3, %c0_4] : memref<128x128xf32, #tpu.memory_space<vmem>>, vector<128x128xf32>
    %cst = arith.constant dense<0.000000e+00> : vector<64x128xf32>
    %6 = tpu.matmul %4, %5, %cst {dimension_numbers = #tpu.dot_dimension_numbers<[1], [0], [0], [1], [0, 0, 1, 1], [], []>} : vector<64x128xf32>, vector<128x128xf32>, vector<64x128xf32> -> vector<64x128xf32>
    %c0_5 = arith.constant 0 : index
    %c0_6 = arith.constant 0 : index
    %7 = vector.load %arg5[%c0_5, %c0_6] : memref<1x128xf32, #tpu.memory_space<vmem>>, vector<1x128xf32>
    %8 = vector.broadcast %7 : vector<1x128xf32> to vector<64x128xf32>
    %9 = arith.addf %6, %8 : vector<64x128xf32>
    %c0_7 = arith.constant 0 : index
    %c0_8 = arith.constant 0 : index
    %10 = vector.load %arg8[%c0_7, %c0_8] : memref<64x128xf32, #tpu.memory_space<vmem>>, vector<64x128xf32>
    tpu.vector_store %arg8[%c0_7, %c0_8], %9 {strides = array<i32>} : memref<64x128xf32, #tpu.memory_space<vmem>>, vector<64x128xf32>,
    %c0_9 = arith.constant 0 : index
    %c0_10 = arith.constant 0 : index
    %11 = vector.load %arg4[%c0_9, %c0_10] : memref<128x128xf32, #tpu.memory_space<vmem>>, vector<128x128xf32>
    %c0_11 = arith.constant 0 : index
    %c0_12 = arith.constant 0 : index
    %12 = vector.load %arg7[%c0_11, %c0_12] : memref<8x128xf32, #tpu.memory_space<vmem>>, vector<8x128xf32>
    %c0_i32_13 = arith.constant 0 : i32
    %c8_i32 = arith.constant 8 : i32
    %13 = arith.muli %c0_i32_13, %c8_i32 : i32
    %14 = tpu.assume_multiple %13, 8 : i32
    %15 = arith.index_cast %14 : i32 to index
    %c0_14 = arith.constant 0 : index
    %16 = vector.load %arg8[%15, %c0_14] : memref<64x128xf32, #tpu.memory_space<vmem>>, vector<8x128xf32>
    %cst_15 = arith.constant dense<0.000000e+00> : vector<8x128xf32>
    %17 = tpu.matmul %12, %11, %cst_15 {dimension_numbers = #tpu.dot_dimension_numbers<[1], [0], [0], [1], [0, 0, 1, 1], [], []>} : vector<8x128xf32>, vector<128x128xf32>, vector<8x128xf32> -> vector<8x128xf32>
    %18 = arith.addf %16, %17 : vector<8x128xf32>
    %19 = math.tanh %18 : vector<8x128xf32>
    %20 = arith.index_cast %c0_i32_13 : i32 to index
    %c0_16 = arith.constant 0 : index
    %c0_17 = arith.constant 0 : index
    %21 = vector.load %arg6[%20, %c0_16, %c0_17] : memref<8x8x128xf32, #tpu.memory_space<vmem>>, vector<1x8x128xf32>
    %22 = vector.shape_cast %21 : vector<1x8x128xf32> to vector<8x128xf32>
    %23 = vector.shape_cast %19 : vector<8x128xf32> to vector<1x8x128xf32>
    tpu.vector_store %arg6[%20, %c0_16, %c0_17], %23 {strides = array<i32>} : memref<8x8x128xf32, #tpu.memory_space<vmem>>, vector<1x8x128xf32>,
    %c1_i32 = arith.constant 1 : i32
    %c8_i32_18 = arith.constant 8 : i32
    %24 = arith.muli %c1_i32, %c8_i32_18 : i32
    %25 = tpu.assume_multiple %24, 8 : i32
    %26 = arith.index_cast %25 : i32 to index
    %c0_19 = arith.constant 0 : index
    %27 = vector.load %arg8[%26, %c0_19] : memref<64x128xf32, #tpu.memory_space<vmem>>, vector<8x128xf32>
    %cst_20 = arith.constant dense<0.000000e+00> : vector<8x128xf32>
    %28 = tpu.matmul %19, %11, %cst_20 {dimension_numbers = #tpu.dot_dimension_numbers<[1], [0], [0], [1], [0, 0, 1, 1], [], []>} : vector<8x128xf32>, vector<128x128xf32>, vector<8x128xf32> -> vector<8x128xf32>
    %29 = arith.addf %27, %28 : vector<8x128xf32>
    %30 = math.tanh %29 : vector<8x128xf32>
    %31 = arith.index_cast %c1_i32 : i32 to index
    %c0_21 = arith.constant 0 : index
    %c0_22 = arith.constant 0 : index
    %32 = vector.load %arg6[%31, %c0_21, %c0_22] : memref<8x8x128xf32, #tpu.memory_space<vmem>>, vector<1x8x128xf32>
    %33 = vector.shape_cast %32 : vector<1x8x128xf32> to vector<8x128xf32>
    %34 = vector.shape_cast %30 : vector<8x128xf32> to vector<1x8x128xf32>
    tpu.vector_store %arg6[%31, %c0_21, %c0_22], %34 {strides = array<i32>} : memref<8x8x128xf32, #tpu.memory_space<vmem>>, vector<1x8x128xf32>,
    %c2_i32 = arith.constant 2 : i32
    %c8_i32_23 = arith.constant 8 : i32
    %35 = arith.muli %c2_i32, %c8_i32_23 : i32
    %36 = tpu.assume_multiple %35, 8 : i32
    %37 = arith.index_cast %36 : i32 to index
    %c0_24 = arith.constant 0 : index
    %38 = vector.load %arg8[%37, %c0_24] : memref<64x128xf32, #tpu.memory_space<vmem>>, vector<8x128xf32>
    %cst_25 = arith.constant dense<0.000000e+00> : vector<8x128xf32>
    %39 = tpu.matmul %30, %11, %cst_25 {dimension_numbers = #tpu.dot_dimension_numbers<[1], [0], [0], [1], [0, 0, 1, 1], [], []>} : vector<8x128xf32>, vector<128x128xf32>, vector<8x128xf32> -> vector<8x128xf32>
    %40 = arith.addf %38, %39 : vector<8x128xf32>
    %41 = math.tanh %40 : vector<8x128xf32>
    %42 = arith.index_cast %c2_i32 : i32 to index
    %c0_26 = arith.constant 0 : index
    %c0_27 = arith.constant 0 : index
    %43 = vector.load %arg6[%42, %c0_26, %c0_27] : memref<8x8x128xf32, #tpu.memory_space<vmem>>, vector<1x8x128xf32>
    %44 = vector.shape_cast %43 : vector<1x8x128xf32> to vector<8x128xf32>
    %45 = vector.shape_cast %41 : vector<8x128xf32> to vector<1x8x128xf32>
    tpu.vector_store %arg6[%42, %c0_26, %c0_27], %45 {strides = array<i32>} : memref<8x8x128xf32, #tpu.memory_space<vmem>>, vector<1x8x128xf32>,
    %c3_i32 = arith.constant 3 : i32
    %c8_i32_28 = arith.constant 8 : i32
    %46 = arith.muli %c3_i32, %c8_i32_28 : i32
    %47 = tpu.assume_multiple %46, 8 : i32
    %48 = arith.index_cast %47 : i32 to index
    %c0_29 = arith.constant 0 : index
    %49 = vector.load %arg8[%48, %c0_29] : memref<64x128xf32, #tpu.memory_space<vmem>>, vector<8x128xf32>
    %cst_30 = arith.constant dense<0.000000e+00> : vector<8x128xf32>
    %50 = tpu.matmul %41, %11, %cst_30 {dimension_numbers = #tpu.dot_dimension_numbers<[1], [0], [0], [1], [0, 0, 1, 1], [], []>} : vector<8x128xf32>, vector<128x128xf32>, vector<8x128xf32> -> vector<8x128xf32>
    %51 = arith.addf %49, %50 : vector<8x128xf32>
    %52 = math.tanh %51 : vector<8x128xf32>
    %53 = arith.index_cast %c3_i32 : i32 to index
    %c0_31 = arith.constant 0 : index
    %c0_32 = arith.constant 0 : index
    %54 = vector.load %arg6[%53, %c0_31, %c0_32] : memref<8x8x128xf32, #tpu.memory_space<vmem>>, vector<1x8x128xf32>
    %55 = vector.shape_cast %54 : vector<1x8x128xf32> to vector<8x128xf32>
    %56 = vector.shape_cast %52 : vector<8x128xf32> to vector<1x8x128xf32>
    tpu.vector_store %arg6[%53, %c0_31, %c0_32], %56 {strides = array<i32>} : memref<8x8x128xf32, #tpu.memory_space<vmem>>, vector<1x8x128xf32>,
    %c4_i32 = arith.constant 4 : i32
    %c8_i32_33 = arith.constant 8 : i32
    %57 = arith.muli %c4_i32, %c8_i32_33 : i32
    %58 = tpu.assume_multiple %57, 8 : i32
    %59 = arith.index_cast %58 : i32 to index
    %c0_34 = arith.constant 0 : index
    %60 = vector.load %arg8[%59, %c0_34] : memref<64x128xf32, #tpu.memory_space<vmem>>, vector<8x128xf32>
    %cst_35 = arith.constant dense<0.000000e+00> : vector<8x128xf32>
    %61 = tpu.matmul %52, %11, %cst_35 {dimension_numbers = #tpu.dot_dimension_numbers<[1], [0], [0], [1], [0, 0, 1, 1], [], []>} : vector<8x128xf32>, vector<128x128xf32>, vector<8x128xf32> -> vector<8x128xf32>
    %62 = arith.addf %60, %61 : vector<8x128xf32>
    %63 = math.tanh %62 : vector<8x128xf32>
    %64 = arith.index_cast %c4_i32 : i32 to index
    %c0_36 = arith.constant 0 : index
    %c0_37 = arith.constant 0 : index
    %65 = vector.load %arg6[%64, %c0_36, %c0_37] : memref<8x8x128xf32, #tpu.memory_space<vmem>>, vector<1x8x128xf32>
    %66 = vector.shape_cast %65 : vector<1x8x128xf32> to vector<8x128xf32>
    %67 = vector.shape_cast %63 : vector<8x128xf32> to vector<1x8x128xf32>
    tpu.vector_store %arg6[%64, %c0_36, %c0_37], %67 {strides = array<i32>} : memref<8x8x128xf32, #tpu.memory_space<vmem>>, vector<1x8x128xf32>,
    %c5_i32 = arith.constant 5 : i32
    %c8_i32_38 = arith.constant 8 : i32
    %68 = arith.muli %c5_i32, %c8_i32_38 : i32
    %69 = tpu.assume_multiple %68, 8 : i32
    %70 = arith.index_cast %69 : i32 to index
    %c0_39 = arith.constant 0 : index
    %71 = vector.load %arg8[%70, %c0_39] : memref<64x128xf32, #tpu.memory_space<vmem>>, vector<8x128xf32>
    %cst_40 = arith.constant dense<0.000000e+00> : vector<8x128xf32>
    %72 = tpu.matmul %63, %11, %cst_40 {dimension_numbers = #tpu.dot_dimension_numbers<[1], [0], [0], [1], [0, 0, 1, 1], [], []>} : vector<8x128xf32>, vector<128x128xf32>, vector<8x128xf32> -> vector<8x128xf32>
    %73 = arith.addf %71, %72 : vector<8x128xf32>
    %74 = math.tanh %73 : vector<8x128xf32>
    %75 = arith.index_cast %c5_i32 : i32 to index
    %c0_41 = arith.constant 0 : index
    %c0_42 = arith.constant 0 : index
    %76 = vector.load %arg6[%75, %c0_41, %c0_42] : memref<8x8x128xf32, #tpu.memory_space<vmem>>, vector<1x8x128xf32>
    %77 = vector.shape_cast %76 : vector<1x8x128xf32> to vector<8x128xf32>
    %78 = vector.shape_cast %74 : vector<8x128xf32> to vector<1x8x128xf32>
    tpu.vector_store %arg6[%75, %c0_41, %c0_42], %78 {strides = array<i32>} : memref<8x8x128xf32, #tpu.memory_space<vmem>>, vector<1x8x128xf32>,
    %c6_i32 = arith.constant 6 : i32
    %c8_i32_43 = arith.constant 8 : i32
    %79 = arith.muli %c6_i32, %c8_i32_43 : i32
    %80 = tpu.assume_multiple %79, 8 : i32
    %81 = arith.index_cast %80 : i32 to index
    %c0_44 = arith.constant 0 : index
    %82 = vector.load %arg8[%81, %c0_44] : memref<64x128xf32, #tpu.memory_space<vmem>>, vector<8x128xf32>
    %cst_45 = arith.constant dense<0.000000e+00> : vector<8x128xf32>
    %83 = tpu.matmul %74, %11, %cst_45 {dimension_numbers = #tpu.dot_dimension_numbers<[1], [0], [0], [1], [0, 0, 1, 1], [], []>} : vector<8x128xf32>, vector<128x128xf32>, vector<8x128xf32> -> vector<8x128xf32>
    %84 = arith.addf %82, %83 : vector<8x128xf32>
    %85 = math.tanh %84 : vector<8x128xf32>
    %86 = arith.index_cast %c6_i32 : i32 to index
    %c0_46 = arith.constant 0 : index
    %c0_47 = arith.constant 0 : index
    %87 = vector.load %arg6[%86, %c0_46, %c0_47] : memref<8x8x128xf32, #tpu.memory_space<vmem>>, vector<1x8x128xf32>
    %88 = vector.shape_cast %87 : vector<1x8x128xf32> to vector<8x128xf32>
    %89 = vector.shape_cast %85 : vector<8x128xf32> to vector<1x8x128xf32>
    tpu.vector_store %arg6[%86, %c0_46, %c0_47], %89 {strides = array<i32>} : memref<8x8x128xf32, #tpu.memory_space<vmem>>, vector<1x8x128xf32>,
    %c7_i32 = arith.constant 7 : i32
    %c8_i32_48 = arith.constant 8 : i32
    %90 = arith.muli %c7_i32, %c8_i32_48 : i32
    %91 = tpu.assume_multiple %90, 8 : i32
    %92 = arith.index_cast %91 : i32 to index
    %c0_49 = arith.constant 0 : index
    %93 = vector.load %arg8[%92, %c0_49] : memref<64x128xf32, #tpu.memory_space<vmem>>, vector<8x128xf32>
    %cst_50 = arith.constant dense<0.000000e+00> : vector<8x128xf32>
    %94 = tpu.matmul %85, %11, %cst_50 {dimension_numbers = #tpu.dot_dimension_numbers<[1], [0], [0], [1], [0, 0, 1, 1], [], []>} : vector<8x128xf32>, vector<128x128xf32>, vector<8x128xf32> -> vector<8x128xf32>
    %95 = arith.addf %93, %94 : vector<8x128xf32>
    %96 = math.tanh %95 : vector<8x128xf32>
    %97 = arith.index_cast %c7_i32 : i32 to index
    %c0_51 = arith.constant 0 : index
    %c0_52 = arith.constant 0 : index
    %98 = vector.load %arg6[%97, %c0_51, %c0_52] : memref<8x8x128xf32, #tpu.memory_space<vmem>>, vector<1x8x128xf32>
    %99 = vector.shape_cast %98 : vector<1x8x128xf32> to vector<8x128xf32>
    %100 = vector.shape_cast %96 : vector<8x128xf32> to vector<1x8x128xf32>
    tpu.vector_store %arg6[%97, %c0_51, %c0_52], %100 {strides = array<i32>} : memref<8x8x128xf32, #tpu.memory_space<vmem>>, vector<1x8x128xf32>,
    %c8_i32_53 = arith.constant 8 : i32
    %c0_54 = arith.constant 0 : index
    %c0_55 = arith.constant 0 : index
    %101 = vector.load %arg7[%c0_54, %c0_55] : memref<8x128xf32, #tpu.memory_space<vmem>>, vector<8x128xf32>
    tpu.vector_store %arg7[%c0_54, %c0_55], %96 {strides = array<i32>} : memref<8x128xf32, #tpu.memory_space<vmem>>, vector<8x128xf32>,
    return
  }
  func.func @transform_0(%arg0: i32, %arg1: i32) -> (i32, i32, i32) {
    %c0_i32 = arith.constant 0 : i32
    %c0_i32_0 = arith.constant 0 : i32
    return %arg1, %arg0, %c0_i32 : i32, i32, i32
  }
  func.func @transform_1(%arg0: i32, %arg1: i32) -> (i32, i32) {
    %c0_i32 = arith.constant 0 : i32
    %c0_i32_0 = arith.constant 0 : i32
    %c0_i32_1 = arith.constant 0 : i32
    return %c0_i32, %c0_i32_0 : i32, i32
  }
  func.func @transform_2(%arg0: i32, %arg1: i32) -> (i32, i32) {
    %c0_i32 = arith.constant 0 : i32
    %c0_i32_0 = arith.constant 0 : i32
    %c0_i32_1 = arith.constant 0 : i32
    return %c0_i32, %c0_i32_0 : i32, i32
  }
  func.func @transform_3(%arg0: i32, %arg1: i32) -> (i32, i32) {
    %c0_i32 = arith.constant 0 : i32
    %c0_i32_0 = arith.constant 0 : i32
    %c0_i32_1 = arith.constant 0 : i32
    return %c0_i32, %c0_i32_0 : i32, i32
  }
  func.func @transform_4(%arg0: i32, %arg1: i32) -> (i32, i32, i32) {
    %c0_i32 = arith.constant 0 : i32
    %c0_i32_0 = arith.constant 0 : i32
    return %arg1, %arg0, %c0_i32 : i32, i32, i32
  }
  func.func @transform_5(%arg0: i32, %arg1: i32) -> (i32, i32) {
    %c0_i32 = arith.constant 0 : i32
    %c0_i32_0 = arith.constant 0 : i32
    return %arg0, %c0_i32 : i32, i32
  }
}

</mosaic_0001>

<llo_original>
// kernel: tpu_custom_call.1
$region0: #{tpu_custom_call.1}
  #allocation0 [shape = 'u32[]', space=smem, size = 0x4, offset = 0x4, fixed_abs, tag = 'smem constant byte address 0x4 - core index']
  #allocation1 [shape = 'u32[144,128]{1,0:T(1,128)}', space=vmem, size = 0x12000, scoped, tag = 'internal scratch']
  #allocation2 [shape = 'f32[64,128]{1,0:T(8,128)}', space=vmem, size = 0x8000, scoped, tag = 'scratch operand']
  %s0 = inlined_call_operand.hbm [shape: f32[8,8,128], index: 0, kind: input, shape index: {}]
  %s1 = inlined_call_operand.hbm [shape: f32[128,128], index: 1, kind: input, shape index: {}]
  %s2 = inlined_call_operand.hbm [shape: f32[128,128], index: 2, kind: input, shape index: {}]
  %s3 = inlined_call_operand.vmem [shape: f32[1,128], index: 3, kind: input, shape index: {}]
  %s4 = inlined_call_operand.hbm [shape: f32[8,8,128], index: 4, kind: output, shape index: {0}]
  %s5 = inlined_call_operand.hbm [shape: f32[8,128], index: 5, kind: output, shape index: {1}]
  %6 = xla_tuple %s4, %s5
  %s7 = sld [smem:[#allocation0]]
  $region50: #{tpu_custom_call.1} parent=0
    _
  %s9 = ssub.s32 1, %s7
  %s10 = scalar_select 0, %s9, %s7
  $region1: #{tpu_custom_call.1} parent=0
    #allocation3 [shape = 'u8[32768]{0}', space=vmem, size = 0x8000, scoped, tag = 'input window, operand 0, single buffered']
    #allocation4 [shape = 's32[1]{0}', space=sflag, size = 0x4, scoped, tag = 'scoped memory for tpu_custom_call.1']
    #allocation5 [shape = 's32[1]{0}', space=sflag, size = 0x4, scoped, tag = 'scoped memory for tpu_custom_call.1']
    #allocation6 [shape = 'u8[65536]{0}', space=vmem, size = 0x10000, scoped, tag = 'input window, operand 1, single buffered']
    #allocation7 [shape = 's32[1]{0}', space=sflag, size = 0x4, scoped, tag = 'scoped memory for tpu_custom_call.1']
    #allocation8 [shape = 'u8[65536]{0}', space=vmem, size = 0x10000, scoped, tag = 'input window, operand 2, single buffered']
    #allocation9 [shape = 'u8[32768]{0}', space=vmem, size = 0x8000, scoped, tag = 'output window, operand 0, single buffered']
    #allocation10 [shape = 'u8[4096]{0}', space=vmem, size = 0x1000, scoped, tag = 'output window, operand 1, single buffered']
    #allocation11 [shape = 's32[1]{0}', space=sflag, size = 0x4, scoped, tag = 'scoped memory for tpu_custom_call.1']
    %11 = vsyncpa [#allocation4], 0
    %12 = vsyncpa [#allocation7], 0
    %13 = vsyncpa [#allocation5], 0
    %14 = vsyncpa [#allocation11], 0
    // Predicated region
    $region2: #{tpu_custom_call.1} parent=1 // pred_check
      _
    $region3: #{tpu_custom_call.1} parent=1 // pred_check_branch
      %16 = sbr.rel (0) target = $region5
    $region4: #{tpu_custom_call.1} parent=1 // pred_region
      %s18 = ssub.s32 1024, 1024
      %19 = vsyncadd [#allocation4], %s18
      %s20 = sshll.u32 [#allocation3], 4
      %s21 = int_to_ptr.vmem [resolvable:$true] %s20
      %26 = dma.hbm_to_vmem [thread:$0]  %s0, 1024, %s21, [#allocation4], 128, 128, 8
    $region5: #{tpu_custom_call.1} parent=1 // pred_fallthru
      _
    // Predicated region
    $region6: #{tpu_custom_call.1} parent=1 // pred_check
      _
    $region7: #{tpu_custom_call.1} parent=1 // pred_check_branch
      %28 = sbr.rel (0) target = $region9
    $region8: #{tpu_custom_call.1} parent=1 // pred_region
      %s30 = ssub.s32 2048, 2048
      %31 = vsyncadd [#allocation7], %s30
      %s32 = sshll.u32 [#allocation6], 4
      %s33 = int_to_ptr.vmem [resolvable:$true] %s32
      %38 = dma.hbm_to_vmem [thread:$0]  %s1, 2048, %s33, [#allocation7], 128, 128, 8
    $region9: #{tpu_custom_call.1} parent=1 // pred_fallthru
      _
    // Predicated region
    $region10: #{tpu_custom_call.1} parent=1 // pred_check
      _
    $region11: #{tpu_custom_call.1} parent=1 // pred_check_branch
      %40 = sbr.rel (0) target = $region13
    $region12: #{tpu_custom_call.1} parent=1 // pred_region
      %s42 = ssub.s32 2048, 2048
      %43 = vsyncadd [#allocation7], %s42
      %s44 = sshll.u32 [#allocation8], 4
      %s45 = int_to_ptr.vmem [resolvable:$true] %s44
      %50 = dma.hbm_to_vmem [thread:$0]  %s2, 2048, %s45, [#allocation7], 128, 128, 8
    $region13: #{tpu_custom_call.1} parent=1 // pred_fallthru
      _
    // Predicated region
    $region14: #{tpu_custom_call.1} parent=1 // pred_check
      _
    $region15: #{tpu_custom_call.1} parent=1 // pred_check_branch
      %52 = sbr.rel (0) target = $region17
    $region16: #{tpu_custom_call.1} parent=1 // pred_region
      _
    $region17: #{tpu_custom_call.1} parent=1 // pred_fallthru
      _
    // Predicated region
    $region18: #{tpu_custom_call.1} parent=1 // pred_check
      _
    $region19: #{tpu_custom_call.1} parent=1 // pred_check_branch
      %54 = sbr.rel (0) target = $region21
    $region20: #{tpu_custom_call.1} parent=1 // pred_region
      %55 = dma.done [#allocation4], 1024
    $region21: #{tpu_custom_call.1} parent=1 // pred_fallthru
      _
    // Predicated region
    $region22: #{tpu_custom_call.1} parent=1 // pred_check
      _
    $region23: #{tpu_custom_call.1} parent=1 // pred_check_branch
      %57 = sbr.rel (0) target = $region25
    $region24: #{tpu_custom_call.1} parent=1 // pred_region
      %58 = dma.done [#allocation7], 2048
    $region25: #{tpu_custom_call.1} parent=1 // pred_fallthru
      _
    // Predicated region
    $region26: #{tpu_custom_call.1} parent=1 // pred_check
      _
    $region27: #{tpu_custom_call.1} parent=1 // pred_check_branch
      %60 = sbr.rel (0) target = $region29
    $region28: #{tpu_custom_call.1} parent=1 // pred_region
      %61 = dma.done [#allocation7], 2048
    $region29: #{tpu_custom_call.1} parent=1 // pred_fallthru
      _
    %p62 = scmp.eq.s32.totalorder 0, 0
    // Predicated region
    $region30: #{tpu_custom_call.1} parent=1 // pred_check
      %p63 = pneg %p62
    $region31: #{tpu_custom_call.1} parent=1 // pred_check_branch
      %65 = sbr.rel (%p63) target = $region33
    $region32: #{tpu_custom_call.1} parent=1 // pred_region
      %66 = vst [vmem:[#allocation10] sm:$0xff] 0.0
    $region33: #{tpu_custom_call.1} parent=1 // pred_fallthru
      _
    %v67 = vld [vmem:[#allocation3] sm:$0xff]
    %v68 = vld [vmem:[#allocation3 + $0x8] sm:$0xff]
    %v69 = vld [vmem:[#allocation3 + $0x10] sm:$0xff]
    %v70 = vld [vmem:[#allocation3 + $0x18] sm:$0xff]
    %v71 = vld [vmem:[#allocation3 + $0x20] sm:$0xff]
    %v72 = vld [vmem:[#allocation3 + $0x28] sm:$0xff]
    %v73 = vld [vmem:[#allocation3 + $0x30] sm:$0xff]
    %v74 = vld [vmem:[#allocation3 + $0x38] sm:$0xff]
    %v75 = vld [vmem:[#allocation6] sm:$0xff]
    %v76 = vld [vmem:[#allocation6 + $0x8] sm:$0xff]
    %v77 = vld [vmem:[#allocation6 + $0x10] sm:$0xff]
    %v78 = vld [vmem:[#allocation6 + $0x18] sm:$0xff]
    %v79 = vld [vmem:[#allocation6 + $0x20] sm:$0xff]
    %v80 = vld [vmem:[#allocation6 + $0x28] sm:$0xff]
    %v81 = vld [vmem:[#allocation6 + $0x30] sm:$0xff]
    %v82 = vld [vmem:[#allocation6 + $0x38] sm:$0xff]
    %v83 = vld [vmem:[#allocation6 + $0x40] sm:$0xff]
    %v84 = vld [vmem:[#allocation6 + $0x48] sm:$0xff]
    %v85 = vld [vmem:[#allocation6 + $0x50] sm:$0xff]
    %v86 = vld [vmem:[#allocation6 + $0x58] sm:$0xff]
    %v87 = vld [vmem:[#allocation6 + $0x60] sm:$0xff]
    %v88 = vld [vmem:[#allocation6 + $0x68] sm:$0xff]
    %v89 = vld [vmem:[#allocation6 + $0x70] sm:$0xff]
    %v90 = vld [vmem:[#allocation6 + $0x78] sm:$0xff]
    %v91 = vld [vmem:[%s3] sm:$0x1]
    %v93 = vlaneseq
    %v94 = vshrl.u32 %v93, 7
    %v95 = vsub.s32 0, %v94
    %v96 = vrot.slane %v91, %v95
    %98 = vmatprep.subr.mxu0 0.0
    %99 = vmatpush1.msra.mxu0 %v75
    %100 = vmatprep.subr.mxu0 0.0
    %101 = vmatpush1.msra.mxu0 %v76
    %102 = vmatprep.subr.mxu0 0.0
    %103 = vmatpush1.msra.mxu0 %v77
    %104 = vmatprep.subr.mxu0 0.0
    %105 = vmatpush1.msra.mxu0 %v78
    %106 = vmatprep.subr.mxu0 0.0
    %107 = vmatpush1.msra.mxu0 %v79
    %108 = vmatprep.subr.mxu0 0.0
    %109 = vmatpush1.msra.mxu0 %v80
    %110 = vmatprep.subr.mxu0 0.0
    %111 = vmatpush1.msra.mxu0 %v81
    %112 = vmatprep.subr.mxu0 0.0
    %113 = vmatpush1.msra.mxu0 %v82
    %114 = vmatprep.subr.mxu0 0.0
    %115 = vmatpush1.msra.mxu0 %v83
    %116 = vmatprep.subr.mxu0 0.0
    %117 = vmatpush1.msra.mxu0 %v84
    %118 = vmatprep.subr.mxu0 0.0
    %119 = vmatpush1.msra.mxu0 %v85
    %120 = vmatprep.subr.mxu0 0.0
    %121 = vmatpush1.msra.mxu0 %v86
    %122 = vmatprep.subr.mxu0 0.0
    %123 = vmatpush1.msra.mxu0 %v87
    %124 = vmatprep.subr.mxu0 0.0
    %125 = vmatpush1.msra.mxu0 %v88
    %126 = vmatprep.subr.mxu0 0.0
    %127 = vmatpush1.msra.mxu0 %v89
    %128 = vmatprep.subr.mxu0 0.0
    %129 = vmatpush1.msra.mxu0 %v90
    %130 = vmatprep.subr.mxu0 0.0
    %131 = vmatpush1.msra.mxu0 0.0
    %132 = vmatprep.subr.mxu0 0.0
    %133 = vmatpush1.msra.mxu0 0.0
    %134 = vmatprep.subr.mxu0 0.0
    %135 = vmatpush1.msra.mxu0 0.0
    %136 = vmatprep.subr.mxu0 0.0
    %137 = vmatpush1.msra.mxu0 0.0
    %138 = vmatprep.subr.mxu0 0.0
    %139 = vmatpush1.msra.mxu0 0.0
    %140 = vmatprep.subr.mxu0 0.0
    %141 = vmatpush1.msra.mxu0 0.0
    %142 = vmatprep.subr.mxu0 0.0
    %143 = vmatpush1.msra.mxu0 0.0
    %144 = vmatprep.subr.mxu0 0.0
    %145 = vmatpush1.msra.mxu0 0.0
    %146 = vmatprep.subr.mxu0 0.0
    %147 = vmatpush1.msra.mxu0 0.0
    %148 = vmatprep.subr.mxu0 0.0
    %149 = vmatpush1.msra.mxu0 0.0
    %150 = vmatprep.subr.mxu0 0.0
    %151 = vmatpush1.msra.mxu0 0.0
    %152 = vmatprep.subr.mxu0 0.0
    %153 = vmatpush1.msra.mxu0 0.0
    %154 = vmatprep.subr.mxu0 0.0
    %155 = vmatpush1.msra.mxu0 0.0
    %156 = vmatprep.subr.mxu0 0.0
    %157 = vmatpush1.msra.mxu0 0.0
    %158 = vmatprep.subr.mxu0 0.0
    %159 = vmatpush1.msra.mxu0 0.0
    %160 = vmatprep.subr.mxu0 0.0
    %161 = vmatpush1.msra.mxu0 0.0
    %162 = vmatprep.mubr.f32.mxu0 0.0
    %163 = vmatmul.mubr.f32.gmra.mrb[0].mxu0 %v67
    %v164 = vpop.f32.mrb[0].mxu0
    %v165 = vadd.f32 %v96, %v164
    %v166 = vpop.f32.mrb[0].mxu0
    %167 = vmatprep.mubr.f32.mxu0 0.0
    %168 = vmatmul.mubr.f32.gmra.mrb[0].mxu0 %v68
    %v169 = vpop.f32.mrb[0].mxu0
    %v170 = vadd.f32 %v96, %v169
    %v171 = vpop.f32.mrb[0].mxu0
    %172 = vmatprep.mubr.f32.mxu0 0.0
    %173 = vmatmul.mubr.f32.gmra.mrb[0].mxu0 %v69
    %v174 = vpop.f32.mrb[0].mxu0
    %v175 = vadd.f32 %v96, %v174
    %v176 = vpop.f32.mrb[0].mxu0
    %177 = vmatprep.mubr.f32.mxu0 0.0
    %178 = vmatmul.mubr.f32.gmra.mrb[0].mxu0 %v70
    %v179 = vpop.f32.mrb[0].mxu0
    %v180 = vadd.f32 %v96, %v179
    %v181 = vpop.f32.mrb[0].mxu0
    %182 = vmatprep.mubr.f32.mxu0 0.0
    %183 = vmatmul.mubr.f32.gmra.mrb[0].mxu0 %v71
    %v184 = vpop.f32.mrb[0].mxu0
    %v185 = vadd.f32 %v96, %v184
    %v186 = vpop.f32.mrb[0].mxu0
    %187 = vmatprep.mubr.f32.mxu0 0.0
    %188 = vmatmul.mubr.f32.gmra.mrb[0].mxu0 %v72
    %v189 = vpop.f32.mrb[0].mxu0
    %v190 = vadd.f32 %v96, %v189
    %v191 = vpop.f32.mrb[0].mxu0
    %192 = vmatprep.mubr.f32.mxu0 0.0
    %193 = vmatmul.mubr.f32.gmra.mrb[0].mxu0 %v73
    %v194 = vpop.f32.mrb[0].mxu0
    %v195 = vadd.f32 %v96, %v194
    %v196 = vpop.f32.mrb[0].mxu0
    %197 = vmatprep.mubr.f32.mxu0 0.0
    %198 = vmatmul.mubr.f32.gmra.mrb[0].mxu0 %v74
    %v199 = vpop.f32.mrb[0].mxu0
    %v200 = vadd.f32 %v96, %v199
    %v201 = vpop.f32.mrb[0].mxu0
    %202 = vdwg.mxu0
    %203 = vst [vmem:[#allocation2] sm:$0xff] %v165
    %204 = vst [vmem:[#allocation2 + $0x8] sm:$0xff] %v170
    %205 = vst [vmem:[#allocation2 + $0x10] sm:$0xff] %v175
    %206 = vst [vmem:[#allocation2 + $0x18] sm:$0xff] %v180
    %207 = vst [vmem:[#allocation2 + $0x20] sm:$0xff] %v185
    %208 = vst [vmem:[#allocation2 + $0x28] sm:$0xff] %v190
    %209 = vst [vmem:[#allocation2 + $0x30] sm:$0xff] %v195
    %210 = vst [vmem:[#allocation2 + $0x38] sm:$0xff] %v200
    %v211 = vld [vmem:[#allocation8] sm:$0xff]
    %v212 = vld [vmem:[#allocation8 + $0x8] sm:$0xff]
    %v213 = vld [vmem:[#allocation8 + $0x10] sm:$0xff]
    %v214 = vld [vmem:[#allocation8 + $0x18] sm:$0xff]
    %v215 = vld [vmem:[#allocation8 + $0x20] sm:$0xff]
    %v216 = vld [vmem:[#allocation8 + $0x28] sm:$0xff]
    %v217 = vld [vmem:[#allocation8 + $0x30] sm:$0xff]
    %v218 = vld [vmem:[#allocation8 + $0x38] sm:$0xff]
    %v219 = vld [vmem:[#allocation8 + $0x40] sm:$0xff]
    %v220 = vld [vmem:[#allocation8 + $0x48] sm:$0xff]
    %v221 = vld [vmem:[#allocation8 + $0x50] sm:$0xff]
    %v222 = vld [vmem:[#allocation8 + $0x58] sm:$0xff]
    %v223 = vld [vmem:[#allocation8 + $0x60] sm:$0xff]
    %v224 = vld [vmem:[#allocation8 + $0x68] sm:$0xff]
    %v225 = vld [vmem:[#allocation8 + $0x70] sm:$0xff]
    %v226 = vld [vmem:[#allocation8 + $0x78] sm:$0xff]
    %v227 = vld [vmem:[#allocation10] sm:$0xff]
    %v228 = vld [vmem:[#allocation2] sm:$0xff]
    %229 = vmatprep.subr.mxu0 0.0
    %230 = vmatpush1.msra.mxu0 %v211
    %231 = vmatprep.subr.mxu0 0.0
    %232 = vmatpush1.msra.mxu0 %v212
    %233 = vmatprep.subr.mxu0 0.0
    %234 = vmatpush1.msra.mxu0 %v213
    %235 = vmatprep.subr.mxu0 0.0
    %236 = vmatpush1.msra.mxu0 %v214
    %237 = vmatprep.subr.mxu0 0.0
    %238 = vmatpush1.msra.mxu0 %v215
    %239 = vmatprep.subr.mxu0 0.0
    %240 = vmatpush1.msra.mxu0 %v216
    %241 = vmatprep.subr.mxu0 0.0
    %242 = vmatpush1.msra.mxu0 %v217
    %243 = vmatprep.subr.mxu0 0.0
    %244 = vmatpush1.msra.mxu0 %v218
    %245 = vmatprep.subr.mxu0 0.0
    %246 = vmatpush1.msra.mxu0 %v219
    %247 = vmatprep.subr.mxu0 0.0
    %248 = vmatpush1.msra.mxu0 %v220
    %249 = vmatprep.subr.mxu0 0.0
    %250 = vmatpush1.msra.mxu0 %v221
    %251 = vmatprep.subr.mxu0 0.0
    %252 = vmatpush1.msra.mxu0 %v222
    %253 = vmatprep.subr.mxu0 0.0
    %254 = vmatpush1.msra.mxu0 %v223
    %255 = vmatprep.subr.mxu0 0.0
    %256 = vmatpush1.msra.mxu0 %v224
    %257 = vmatprep.subr.mxu0 0.0
    %258 = vmatpush1.msra.mxu0 %v225
    %259 = vmatprep.subr.mxu0 0.0
    %260 = vmatpush1.msra.mxu0 %v226
    %261 = vmatprep.subr.mxu0 0.0
    %262 = vmatpush1.msra.mxu0 0.0
    %263 = vmatprep.subr.mxu0 0.0
    %264 = vmatpush1.msra.mxu0 0.0
    %265 = vmatprep.subr.mxu0 0.0
    %266 = vmatpush1.msra.mxu0 0.0
    %267 = vmatprep.subr.mxu0 0.0
    %268 = vmatpush1.msra.mxu0 0.0
    %269 = vmatprep.subr.mxu0 0.0
    %270 = vmatpush1.msra.mxu0 0.0
    %271 = vmatprep.subr.mxu0 0.0
    %272 = vmatpush1.msra.mxu0 0.0
    %273 = vmatprep.subr.mxu0 0.0
    %274 = vmatpush1.msra.mxu0 0.0
    %275 = vmatprep.subr.mxu0 0.0
    %276 = vmatpush1.msra.mxu0 0.0
    %277 = vmatprep.subr.mxu0 0.0
    %278 = vmatpush1.msra.mxu0 0.0
    %279 = vmatprep.subr.mxu0 0.0
    %280 = vmatpush1.msra.mxu0 0.0
    %281 = vmatprep.subr.mxu0 0.0
    %282 = vmatpush1.msra.mxu0 0.0
    %283 = vmatprep.subr.mxu0 0.0
    %284 = vmatpush1.msra.mxu0 0.0
    %285 = vmatprep.subr.mxu0 0.0
    %286 = vmatpush1.msra.mxu0 0.0
    %287 = vmatprep.subr.mxu0 0.0
    %288 = vmatpush1.msra.mxu0 0.0
    %289 = vmatprep.subr.mxu0 0.0
    %290 = vmatpush1.msra.mxu0 0.0
    %291 = vmatprep.subr.mxu0 0.0
    %292 = vmatpush1.msra.mxu0 0.0
    %293 = vmatprep.mubr.f32.mxu0 0.0
    %294 = vmatmul.mubr.f32.gmra.mrb[0].mxu0 %v227
    %v295 = vpop.f32.mrb[0].mxu0
    %v296 = vadd.f32 0.0, %v295
    %v297 = vpop.f32.mrb[0].mxu0
    %298 = vdwg.mxu0
    %v299 = vadd.f32 %v228, %v296
    %v300 = vtanh.pop %v299
    %301 = vst [vmem:[#allocation9] sm:$0xff] %v300
    %s302 = scalar_lea.vmem [#allocation2], 8
    %v303 = vld [vmem:[%s302] sm:$0xff]
    %304 = vmatprep.subr.mxu0 0.0
    %305 = vmatpush1.msra.mxu0 %v211
    %306 = vmatprep.subr.mxu0 0.0
    %307 = vmatpush1.msra.mxu0 %v212
    %308 = vmatprep.subr.mxu0 0.0
    %309 = vmatpush1.msra.mxu0 %v213
    %310 = vmatprep.subr.mxu0 0.0
    %311 = vmatpush1.msra.mxu0 %v214
    %312 = vmatprep.subr.mxu0 0.0
    %313 = vmatpush1.msra.mxu0 %v215
    %314 = vmatprep.subr.mxu0 0.0
    %315 = vmatpush1.msra.mxu0 %v216
    %316 = vmatprep.subr.mxu0 0.0
    %317 = vmatpush1.msra.mxu0 %v217
    %318 = vmatprep.subr.mxu0 0.0
    %319 = vmatpush1.msra.mxu0 %v218
    %320 = vmatprep.subr.mxu0 0.0
    %321 = vmatpush1.msra.mxu0 %v219
    %322 = vmatprep.subr.mxu0 0.0
    %323 = vmatpush1.msra.mxu0 %v220
    %324 = vmatprep.subr.mxu0 0.0
    %325 = vmatpush1.msra.mxu0 %v221
    %326 = vmatprep.subr.mxu0 0.0
    %327 = vmatpush1.msra.mxu0 %v222
    %328 = vmatprep.subr.mxu0 0.0
    %329 = vmatpush1.msra.mxu0 %v223
    %330 = vmatprep.subr.mxu0 0.0
    %331 = vmatpush1.msra.mxu0 %v224
    %332 = vmatprep.subr.mxu0 0.0
    %333 = vmatpush1.msra.mxu0 %v225
    %334 = vmatprep.subr.mxu0 0.0
    %335 = vmatpush1.msra.mxu0 %v226
    %336 = vmatprep.subr.mxu0 0.0
    %337 = vmatpush1.msra.mxu0 0.0
    %338 = vmatprep.subr.mxu0 0.0
    %339 = vmatpush1.msra.mxu0 0.0
    %340 = vmatprep.subr.mxu0 0.0
    %341 = vmatpush1.msra.mxu0 0.0
    %342 = vmatprep.subr.mxu0 0.0
    %343 = vmatpush1.msra.mxu0 0.0
    %344 = vmatprep.subr.mxu0 0.0
    %345 = vmatpush1.msra.mxu0 0.0
    %346 = vmatprep.subr.mxu0 0.0
    %347 = vmatpush1.msra.mxu0 0.0
    %348 = vmatprep.subr.mxu0 0.0
    %349 = vmatpush1.msra.mxu0 0.0
    %350 = vmatprep.subr.mxu0 0.0
    %351 = vmatpush1.msra.mxu0 0.0
    %352 = vmatprep.subr.mxu0 0.0
    %353 = vmatpush1.msra.mxu0 0.0
    %354 = vmatprep.subr.mxu0 0.0
    %355 = vmatpush1.msra.mxu0 0.0
    %356 = vmatprep.subr.mxu0 0.0
    %357 = vmatpush1.msra.mxu0 0.0
    %358 = vmatprep.subr.mxu0 0.0
    %359 = vmatpush1.msra.mxu0 0.0
    %360 = vmatprep.subr.mxu0 0.0
    %361 = vmatpush1.msra.mxu0 0.0
    %362 = vmatprep.subr.mxu0 0.0
    %363 = vmatpush1.msra.mxu0 0.0
    %364 = vmatprep.subr.mxu0 0.0
    %365 = vmatpush1.msra.mxu0 0.0
    %366 = vmatprep.subr.mxu0 0.0
    %367 = vmatpush1.msra.mxu0 0.0
    %368 = vmatprep.mubr.f32.mxu0 0.0
    %369 = vmatmul.mubr.f32.gmra.mrb[0].mxu0 %v300
    %v370 = vpop.f32.mrb[0].mxu0
    %v371 = vadd.f32 0.0, %v370
    %v372 = vpop.f32.mrb[0].mxu0
    %373 = vdwg.mxu0
    %v374 = vadd.f32 %v303, %v371
    %v375 = vtanh.pop %v374
    %s376 = scalar_lea.vmem [#allocation9], 8
    %377 = vst [vmem:[%s376] sm:$0xff] %v375
    %s378 = scalar_lea.vmem [#allocation2], 16
    %v379 = vld [vmem:[%s378] sm:$0xff]
    %380 = vmatprep.subr.mxu0 0.0
    %381 = vmatpush1.msra.mxu0 %v211
    %382 = vmatprep.subr.mxu0 0.0
    %383 = vmatpush1.msra.mxu0 %v212
    %384 = vmatprep.subr.mxu0 0.0
    %385 = vmatpush1.msra.mxu0 %v213
    %386 = vmatprep.subr.mxu0 0.0
    %387 = vmatpush1.msra.mxu0 %v214
    %388 = vmatprep.subr.mxu0 0.0
    %389 = vmatpush1.msra.mxu0 %v215
    %390 = vmatprep.subr.mxu0 0.0
    %391 = vmatpush1.msra.mxu0 %v216
    %392 = vmatprep.subr.mxu0 0.0
    %393 = vmatpush1.msra.mxu0 %v217
    %394 = vmatprep.subr.mxu0 0.0
    %395 = vmatpush1.msra.mxu0 %v218
    %396 = vmatprep.subr.mxu0 0.0
    %397 = vmatpush1.msra.mxu0 %v219
    %398 = vmatprep.subr.mxu0 0.0
    %399 = vmatpush1.msra.mxu0 %v220
    %400 = vmatprep.subr.mxu0 0.0
    %401 = vmatpush1.msra.mxu0 %v221
    %402 = vmatprep.subr.mxu0 0.0
    %403 = vmatpush1.msra.mxu0 %v222
    %404 = vmatprep.subr.mxu0 0.0
    %405 = vmatpush1.msra.mxu0 %v223
    %406 = vmatprep.subr.mxu0 0.0
    %407 = vmatpush1.msra.mxu0 %v224
    %408 = vmatprep.subr.mxu0 0.0
    %409 = vmatpush1.msra.mxu0 %v225
    %410 = vmatprep.subr.mxu0 0.0
    %411 = vmatpush1.msra.mxu0 %v226
    %412 = vmatprep.subr.mxu0 0.0
    %413 = vmatpush1.msra.mxu0 0.0
    %414 = vmatprep.subr.mxu0 0.0
    %415 = vmatpush1.msra.mxu0 0.0
    %416 = vmatprep.subr.mxu0 0.0
    %417 = vmatpush1.msra.mxu0 0.0
    %418 = vmatprep.subr.mxu0 0.0
    %419 = vmatpush1.msra.mxu0 0.0
    %420 = vmatprep.subr.mxu0 0.0
    %421 = vmatpush1.msra.mxu0 0.0
    %422 = vmatprep.subr.mxu0 0.0
    %423 = vmatpush1.msra.mxu0 0.0
    %424 = vmatprep.subr.mxu0 0.0
    %425 = vmatpush1.msra.mxu0 0.0
    %426 = vmatprep.subr.mxu0 0.0
    %427 = vmatpush1.msra.mxu0 0.0
    %428 = vmatprep.subr.mxu0 0.0
    %429 = vmatpush1.msra.mxu0 0.0
    %430 = vmatprep.subr.mxu0 0.0
    %431 = vmatpush1.msra.mxu0 0.0
    %432 = vmatprep.subr.mxu0 0.0
    %433 = vmatpush1.msra.mxu0 0.0
    %434 = vmatprep.subr.mxu0 0.0
    %435 = vmatpush1.msra.mxu0 0.0
    %436 = vmatprep.subr.mxu0 0.0
    %437 = vmatpush1.msra.mxu0 0.0
    %438 = vmatprep.subr.mxu0 0.0
    %439 = vmatpush1.msra.mxu0 0.0
    %440 = vmatprep.subr.mxu0 0.0
    %441 = vmatpush1.msra.mxu0 0.0
    %442 = vmatprep.subr.mxu0 0.0
    %443 = vmatpush1.msra.mxu0 0.0
    %444 = vmatprep.mubr.f32.mxu0 0.0
    %445 = vmatmul.mubr.f32.gmra.mrb[0].mxu0 %v375
    %v446 = vpop.f32.mrb[0].mxu0
    %v447 = vadd.f32 0.0, %v446
    %v448 = vpop.f32.mrb[0].mxu0
    %449 = vdwg.mxu0
    %v450 = vadd.f32 %v379, %v447
    %v451 = vtanh.pop %v450
    %s452 = scalar_lea.vmem [#allocation9], 16
    %453 = vst [vmem:[%s452] sm:$0xff] %v451
    %s454 = scalar_lea.vmem [#allocation2], 24
    %v455 = vld [vmem:[%s454] sm:$0xff]
    %456 = vmatprep.subr.mxu0 0.0
    %457 = vmatpush1.msra.mxu0 %v211
    %458 = vmatprep.subr.mxu0 0.0
    %459 = vmatpush1.msra.mxu0 %v212
    %460 = vmatprep.subr.mxu0 0.0
    %461 = vmatpush1.msra.mxu0 %v213
    %462 = vmatprep.subr.mxu0 0.0
    %463 = vmatpush1.msra.mxu0 %v214
    %464 = vmatprep.subr.mxu0 0.0
    %465 = vmatpush1.msra.mxu0 %v215
    %466 = vmatprep.subr.mxu0 0.0
    %467 = vmatpush1.msra.mxu0 %v216
    %468 = vmatprep.subr.mxu0 0.0
    %469 = vmatpush1.msra.mxu0 %v217
    %470 = vmatprep.subr.mxu0 0.0
    %471 = vmatpush1.msra.mxu0 %v218
    %472 = vmatprep.subr.mxu0 0.0
    %473 = vmatpush1.msra.mxu0 %v219
    %474 = vmatprep.subr.mxu0 0.0
    %475 = vmatpush1.msra.mxu0 %v220
    %476 = vmatprep.subr.mxu0 0.0
    %477 = vmatpush1.msra.mxu0 %v221
    %478 = vmatprep.subr.mxu0 0.0
    %479 = vmatpush1.msra.mxu0 %v222
    %480 = vmatprep.subr.mxu0 0.0
    %481 = vmatpush1.msra.mxu0 %v223
    %482 = vmatprep.subr.mxu0 0.0
    %483 = vmatpush1.msra.mxu0 %v224
    %484 = vmatprep.subr.mxu0 0.0
    %485 = vmatpush1.msra.mxu0 %v225
    %486 = vmatprep.subr.mxu0 0.0
    %487 = vmatpush1.msra.mxu0 %v226
    %488 = vmatprep.subr.mxu0 0.0
    %489 = vmatpush1.msra.mxu0 0.0
    %490 = vmatprep.subr.mxu0 0.0
    %491 = vmatpush1.msra.mxu0 0.0
    %492 = vmatprep.subr.mxu0 0.0
    %493 = vmatpush1.msra.mxu0 0.0
    %494 = vmatprep.subr.mxu0 0.0
    %495 = vmatpush1.msra.mxu0 0.0
    %496 = vmatprep.subr.mxu0 0.0
    %497 = vmatpush1.msra.mxu0 0.0
    %498 = vmatprep.subr.mxu0 0.0
    %499 = vmatpush1.msra.mxu0 0.0
    %500 = vmatprep.subr.mxu0 0.0
    %501 = vmatpush1.msra.mxu0 0.0
    %502 = vmatprep.subr.mxu0 0.0
    %503 = vmatpush1.msra.mxu0 0.0
    %504 = vmatprep.subr.mxu0 0.0
    %505 = vmatpush1.msra.mxu0 0.0
    %506 = vmatprep.subr.mxu0 0.0
    %507 = vmatpush1.msra.mxu0 0.0
    %508 = vmatprep.subr.mxu0 0.0
    %509 = vmatpush1.msra.mxu0 0.0
    %510 = vmatprep.subr.mxu0 0.0
    %511 = vmatpush1.msra.mxu0 0.0
    %512 = vmatprep.subr.mxu0 0.0
    %513 = vmatpush1.msra.mxu0 0.0
    %514 = vmatprep.subr.mxu0 0.0
    %515 = vmatpush1.msra.mxu0 0.0
    %516 = vmatprep.subr.mxu0 0.0
    %517 = vmatpush1.msra.mxu0 0.0
    %518 = vmatprep.subr.mxu0 0.0
    %519 = vmatpush1.msra.mxu0 0.0
    %520 = vmatprep.mubr.f32.mxu0 0.0
    %521 = vmatmul.mubr.f32.gmra.mrb[0].mxu0 %v451
    %v522 = vpop.f32.mrb[0].mxu0
    %v523 = vadd.f32 0.0, %v522
    %v524 = vpop.f32.mrb[0].mxu0
    %525 = vdwg.mxu0
    %v526 = vadd.f32 %v455, %v523
    %v527 = vtanh.pop %v526
    %s528 = scalar_lea.vmem [#allocation9], 24
    %529 = vst [vmem:[%s528] sm:$0xff] %v527
    %s530 = scalar_lea.vmem [#allocation2], 32
    %v531 = vld [vmem:[%s530] sm:$0xff]
    %532 = vmatprep.subr.mxu0 0.0
    %533 = vmatpush1.msra.mxu0 %v211
    %534 = vmatprep.subr.mxu0 0.0
    %535 = vmatpush1.msra.mxu0 %v212
    %536 = vmatprep.subr.mxu0 0.0
    %537 = vmatpush1.msra.mxu0 %v213
    %538 = vmatprep.subr.mxu0 0.0
    %539 = vmatpush1.msra.mxu0 %v214
    %540 = vmatprep.subr.mxu0 0.0
    %541 = vmatpush1.msra.mxu0 %v215
    %542 = vmatprep.subr.mxu0 0.0
    %543 = vmatpush1.msra.mxu0 %v216
    %544 = vmatprep.subr.mxu0 0.0
    %545 = vmatpush1.msra.mxu0 %v217
    %546 = vmatprep.subr.mxu0 0.0
    %547 = vmatpush1.msra.mxu0 %v218
    %548 = vmatprep.subr.mxu0 0.0
    %549 = vmatpush1.msra.mxu0 %v219
    %550 = vmatprep.subr.mxu0 0.0
    %551 = vmatpush1.msra.mxu0 %v220
    %552 = vmatprep.subr.mxu0 0.0
    %553 = vmatpush1.msra.mxu0 %v221
    %554 = vmatprep.subr.mxu0 0.0
    %555 = vmatpush1.msra.mxu0 %v222
    %556 = vmatprep.subr.mxu0 0.0
    %557 = vmatpush1.msra.mxu0 %v223
    %558 = vmatprep.subr.mxu0 0.0
    %559 = vmatpush1.msra.mxu0 %v224
    %560 = vmatprep.subr.mxu0 0.0
    %561 = vmatpush1.msra.mxu0 %v225
    %562 = vmatprep.subr.mxu0 0.0
    %563 = vmatpush1.msra.mxu0 %v226
    %564 = vmatprep.subr.mxu0 0.0
    %565 = vmatpush1.msra.mxu0 0.0
    %566 = vmatprep.subr.mxu0 0.0
    %567 = vmatpush1.msra.mxu0 0.0
    %568 = vmatprep.subr.mxu0 0.0
    %569 = vmatpush1.msra.mxu0 0.0
    %570 = vmatprep.subr.mxu0 0.0
    %571 = vmatpush1.msra.mxu0 0.0
    %572 = vmatprep.subr.mxu0 0.0
    %573 = vmatpush1.msra.mxu0 0.0
    %574 = vmatprep.subr.mxu0 0.0
    %575 = vmatpush1.msra.mxu0 0.0
    %576 = vmatprep.subr.mxu0 0.0
    %577 = vmatpush1.msra.mxu0 0.0
    %578 = vmatprep.subr.mxu0 0.0
    %579 = vmatpush1.msra.mxu0 0.0
    %580 = vmatprep.subr.mxu0 0.0
    %581 = vmatpush1.msra.mxu0 0.0
    %582 = vmatprep.subr.mxu0 0.0
    %583 = vmatpush1.msra.mxu0 0.0
    %584 = vmatprep.subr.mxu0 0.0
    %585 = vmatpush1.msra.mxu0 0.0
    %586 = vmatprep.subr.mxu0 0.0
    %587 = vmatpush1.msra.mxu0 0.0
    %588 = vmatprep.subr.mxu0 0.0
    %589 = vmatpush1.msra.mxu0 0.0
    %590 = vmatprep.subr.mxu0 0.0
    %591 = vmatpush1.msra.mxu0 0.0
    %592 = vmatprep.subr.mxu0 0.0
    %593 = vmatpush1.msra.mxu0 0.0
    %594 = vmatprep.subr.mxu0 0.0
    %595 = vmatpush1.msra.mxu0 0.0
    %596 = vmatprep.mubr.f32.mxu0 0.0
    %597 = vmatmul.mubr.f32.gmra.mrb[0].mxu0 %v527
    %v598 = vpop.f32.mrb[0].mxu0
    %v599 = vadd.f32 0.0, %v598
    %v600 = vpop.f32.mrb[0].mxu0
    %601 = vdwg.mxu0
    %v602 = vadd.f32 %v531, %v599
    %v603 = vtanh.pop %v602
    %s604 = scalar_lea.vmem [#allocation9], 32
    %605 = vst [vmem:[%s604] sm:$0xff] %v603
    %s606 = scalar_lea.vmem [#allocation2], 40
    %v607 = vld [vmem:[%s606] sm:$0xff]
    %608 = vmatprep.subr.mxu0 0.0
    %609 = vmatpush1.msra.mxu0 %v211
    %610 = vmatprep.subr.mxu0 0.0
    %611 = vmatpush1.msra.mxu0 %v212
    %612 = vmatprep.subr.mxu0 0.0
    %613 = vmatpush1.msra.mxu0 %v213
    %614 = vmatprep.subr.mxu0 0.0
    %615 = vmatpush1.msra.mxu0 %v214
    %616 = vmatprep.subr.mxu0 0.0
    %617 = vmatpush1.msra.mxu0 %v215
    %618 = vmatprep.subr.mxu0 0.0
    %619 = vmatpush1.msra.mxu0 %v216
    %620 = vmatprep.subr.mxu0 0.0
    %621 = vmatpush1.msra.mxu0 %v217
    %622 = vmatprep.subr.mxu0 0.0
    %623 = vmatpush1.msra.mxu0 %v218
    %624 = vmatprep.subr.mxu0 0.0
    %625 = vmatpush1.msra.mxu0 %v219
    %626 = vmatprep.subr.mxu0 0.0
    %627 = vmatpush1.msra.mxu0 %v220
    %628 = vmatprep.subr.mxu0 0.0
    %629 = vmatpush1.msra.mxu0 %v221
    %630 = vmatprep.subr.mxu0 0.0
    %631 = vmatpush1.msra.mxu0 %v222
    %632 = vmatprep.subr.mxu0 0.0
    %633 = vmatpush1.msra.mxu0 %v223
    %634 = vmatprep.subr.mxu0 0.0
    %635 = vmatpush1.msra.mxu0 %v224
    %636 = vmatprep.subr.mxu0 0.0
    %637 = vmatpush1.msra.mxu0 %v225
    %638 = vmatprep.subr.mxu0 0.0
    %639 = vmatpush1.msra.mxu0 %v226
    %640 = vmatprep.subr.mxu0 0.0
    %641 = vmatpush1.msra.mxu0 0.0
    %642 = vmatprep.subr.mxu0 0.0
    %643 = vmatpush1.msra.mxu0 0.0
    %644 = vmatprep.subr.mxu0 0.0
    %645 = vmatpush1.msra.mxu0 0.0
    %646 = vmatprep.subr.mxu0 0.0
    %647 = vmatpush1.msra.mxu0 0.0
    %648 = vmatprep.subr.mxu0 0.0
    %649 = vmatpush1.msra.mxu0 0.0
    %650 = vmatprep.subr.mxu0 0.0
    %651 = vmatpush1.msra.mxu0 0.0
    %652 = vmatprep.subr.mxu0 0.0
    %653 = vmatpush1.msra.mxu0 0.0
    %654 = vmatprep.subr.mxu0 0.0
    %655 = vmatpush1.msra.mxu0 0.0
    %656 = vmatprep.subr.mxu0 0.0
    %657 = vmatpush1.msra.mxu0 0.0
    %658 = vmatprep.subr.mxu0 0.0
    %659 = vmatpush1.msra.mxu0 0.0
    %660 = vmatprep.subr.mxu0 0.0
    %661 = vmatpush1.msra.mxu0 0.0
    %662 = vmatprep.subr.mxu0 0.0
    %663 = vmatpush1.msra.mxu0 0.0
    %664 = vmatprep.subr.mxu0 0.0
    %665 = vmatpush1.msra.mxu0 0.0
    %666 = vmatprep.subr.mxu0 0.0
    %667 = vmatpush1.msra.mxu0 0.0
    %668 = vmatprep.subr.mxu0 0.0
    %669 = vmatpush1.msra.mxu0 0.0
    %670 = vmatprep.subr.mxu0 0.0
    %671 = vmatpush1.msra.mxu0 0.0
    %672 = vmatprep.mubr.f32.mxu0 0.0
    %673 = vmatmul.mubr.f32.gmra.mrb[0].mxu0 %v603
    %v674 = vpop.f32.mrb[0].mxu0
    %v675 = vadd.f32 0.0, %v674
    %v676 = vpop.f32.mrb[0].mxu0
    %677 = vdwg.mxu0
    %v678 = vadd.f32 %v607, %v675
    %v679 = vtanh.pop %v678
    %s680 = scalar_lea.vmem [#allocation9], 40
    %681 = vst [vmem:[%s680] sm:$0xff] %v679
    %s682 = scalar_lea.vmem [#allocation2], 48
    %v683 = vld [vmem:[%s682] sm:$0xff]
    %684 = vmatprep.subr.mxu0 0.0
    %685 = vmatpush1.msra.mxu0 %v211
    %686 = vmatprep.subr.mxu0 0.0
    %687 = vmatpush1.msra.mxu0 %v212
    %688 = vmatprep.subr.mxu0 0.0
    %689 = vmatpush1.msra.mxu0 %v213
    %690 = vmatprep.subr.mxu0 0.0
    %691 = vmatpush1.msra.mxu0 %v214
    %692 = vmatprep.subr.mxu0 0.0
    %693 = vmatpush1.msra.mxu0 %v215
    %694 = vmatprep.subr.mxu0 0.0
    %695 = vmatpush1.msra.mxu0 %v216
    %696 = vmatprep.subr.mxu0 0.0
    %697 = vmatpush1.msra.mxu0 %v217
    %698 = vmatprep.subr.mxu0 0.0
    %699 = vmatpush1.msra.mxu0 %v218
    %700 = vmatprep.subr.mxu0 0.0
    %701 = vmatpush1.msra.mxu0 %v219
    %702 = vmatprep.subr.mxu0 0.0
    %703 = vmatpush1.msra.mxu0 %v220
    %704 = vmatprep.subr.mxu0 0.0
    %705 = vmatpush1.msra.mxu0 %v221
    %706 = vmatprep.subr.mxu0 0.0
    %707 = vmatpush1.msra.mxu0 %v222
    %708 = vmatprep.subr.mxu0 0.0
    %709 = vmatpush1.msra.mxu0 %v223
    %710 = vmatprep.subr.mxu0 0.0
    %711 = vmatpush1.msra.mxu0 %v224
    %712 = vmatprep.subr.mxu0 0.0
    %713 = vmatpush1.msra.mxu0 %v225
    %714 = vmatprep.subr.mxu0 0.0
    %715 = vmatpush1.msra.mxu0 %v226
    %716 = vmatprep.subr.mxu0 0.0
    %717 = vmatpush1.msra.mxu0 0.0
    %718 = vmatprep.subr.mxu0 0.0
    %719 = vmatpush1.msra.mxu0 0.0
    %720 = vmatprep.subr.mxu0 0.0
    %721 = vmatpush1.msra.mxu0 0.0
    %722 = vmatprep.subr.mxu0 0.0
    %723 = vmatpush1.msra.mxu0 0.0
    %724 = vmatprep.subr.mxu0 0.0
    %725 = vmatpush1.msra.mxu0 0.0
    %726 = vmatprep.subr.mxu0 0.0
    %727 = vmatpush1.msra.mxu0 0.0
    %728 = vmatprep.subr.mxu0 0.0
    %729 = vmatpush1.msra.mxu0 0.0
    %730 = vmatprep.subr.mxu0 0.0
    %731 = vmatpush1.msra.mxu0 0.0
    %732 = vmatprep.subr.mxu0 0.0
    %733 = vmatpush1.msra.mxu0 0.0
    %734 = vmatprep.subr.mxu0 0.0
    %735 = vmatpush1.msra.mxu0 0.0
    %736 = vmatprep.subr.mxu0 0.0
    %737 = vmatpush1.msra.mxu0 0.0
    %738 = vmatprep.subr.mxu0 0.0
    %739 = vmatpush1.msra.mxu0 0.0
    %740 = vmatprep.subr.mxu0 0.0
    %741 = vmatpush1.msra.mxu0 0.0
    %742 = vmatprep.subr.mxu0 0.0
    %743 = vmatpush1.msra.mxu0 0.0
    %744 = vmatprep.subr.mxu0 0.0
    %745 = vmatpush1.msra.mxu0 0.0
    %746 = vmatprep.subr.mxu0 0.0
    %747 = vmatpush1.msra.mxu0 0.0
    %748 = vmatprep.mubr.f32.mxu0 0.0
    %749 = vmatmul.mubr.f32.gmra.mrb[0].mxu0 %v679
    %v750 = vpop.f32.mrb[0].mxu0
    %v751 = vadd.f32 0.0, %v750
    %v752 = vpop.f32.mrb[0].mxu0
    %753 = vdwg.mxu0
    %v754 = vadd.f32 %v683, %v751
    %v755 = vtanh.pop %v754
    %s756 = scalar_lea.vmem [#allocation9], 48
    %757 = vst [vmem:[%s756] sm:$0xff] %v755
    %s758 = scalar_lea.vmem [#allocation2], 56
    %v759 = vld [vmem:[%s758] sm:$0xff]
    %760 = vmatprep.subr.mxu0 0.0
    %761 = vmatpush1.msra.mxu0 %v211
    %762 = vmatprep.subr.mxu0 0.0
    %763 = vmatpush1.msra.mxu0 %v212
    %764 = vmatprep.subr.mxu0 0.0
    %765 = vmatpush1.msra.mxu0 %v213
    %766 = vmatprep.subr.mxu0 0.0
    %767 = vmatpush1.msra.mxu0 %v214
    %768 = vmatprep.subr.mxu0 0.0
    %769 = vmatpush1.msra.mxu0 %v215
    %770 = vmatprep.subr.mxu0 0.0
    %771 = vmatpush1.msra.mxu0 %v216
    %772 = vmatprep.subr.mxu0 0.0
    %773 = vmatpush1.msra.mxu0 %v217
    %774 = vmatprep.subr.mxu0 0.0
    %775 = vmatpush1.msra.mxu0 %v218
    %776 = vmatprep.subr.mxu0 0.0
    %777 = vmatpush1.msra.mxu0 %v219
    %778 = vmatprep.subr.mxu0 0.0
    %779 = vmatpush1.msra.mxu0 %v220
    %780 = vmatprep.subr.mxu0 0.0
    %781 = vmatpush1.msra.mxu0 %v221
    %782 = vmatprep.subr.mxu0 0.0
    %783 = vmatpush1.msra.mxu0 %v222
    %784 = vmatprep.subr.mxu0 0.0
    %785 = vmatpush1.msra.mxu0 %v223
    %786 = vmatprep.subr.mxu0 0.0
    %787 = vmatpush1.msra.mxu0 %v224
    %788 = vmatprep.subr.mxu0 0.0
    %789 = vmatpush1.msra.mxu0 %v225
    %790 = vmatprep.subr.mxu0 0.0
    %791 = vmatpush1.msra.mxu0 %v226
    %792 = vmatprep.subr.mxu0 0.0
    %793 = vmatpush1.msra.mxu0 0.0
    %794 = vmatprep.subr.mxu0 0.0
    %795 = vmatpush1.msra.mxu0 0.0
    %796 = vmatprep.subr.mxu0 0.0
    %797 = vmatpush1.msra.mxu0 0.0
    %798 = vmatprep.subr.mxu0 0.0
    %799 = vmatpush1.msra.mxu0 0.0
    %800 = vmatprep.subr.mxu0 0.0
    %801 = vmatpush1.msra.mxu0 0.0
    %802 = vmatprep.subr.mxu0 0.0
    %803 = vmatpush1.msra.mxu0 0.0
    %804 = vmatprep.subr.mxu0 0.0
    %805 = vmatpush1.msra.mxu0 0.0
    %806 = vmatprep.subr.mxu0 0.0
    %807 = vmatpush1.msra.mxu0 0.0
    %808 = vmatprep.subr.mxu0 0.0
    %809 = vmatpush1.msra.mxu0 0.0
    %810 = vmatprep.subr.mxu0 0.0
    %811 = vmatpush1.msra.mxu0 0.0
    %812 = vmatprep.subr.mxu0 0.0
    %813 = vmatpush1.msra.mxu0 0.0
    %814 = vmatprep.subr.mxu0 0.0
    %815 = vmatpush1.msra.mxu0 0.0
    %816 = vmatprep.subr.mxu0 0.0
    %817 = vmatpush1.msra.mxu0 0.0
    %818 = vmatprep.subr.mxu0 0.0
    %819 = vmatpush1.msra.mxu0 0.0
    %820 = vmatprep.subr.mxu0 0.0
    %821 = vmatpush1.msra.mxu0 0.0
    %822 = vmatprep.subr.mxu0 0.0
    %823 = vmatpush1.msra.mxu0 0.0
    %824 = vmatprep.mubr.f32.mxu0 0.0
    %825 = vmatmul.mubr.f32.gmra.mrb[0].mxu0 %v755
    %v826 = vpop.f32.mrb[0].mxu0
    %v827 = vadd.f32 0.0, %v826
    %v828 = vpop.f32.mrb[0].mxu0
    %829 = vdwg.mxu0
    %v830 = vadd.f32 %v759, %v827
    %v831 = vtanh.pop %v830
    %s832 = scalar_lea.vmem [#allocation9], 56
    %833 = vst [vmem:[%s832] sm:$0xff] %v831
    %834 = vst [vmem:[#allocation10] sm:$0xff] %v831
    // Predicated region
    $region34: #{tpu_custom_call.1} parent=1 // pred_check
      _
    $region35: #{tpu_custom_call.1} parent=1 // pred_check_branch
      %836 = sbr.rel (0) target = $region37
    $region36: #{tpu_custom_call.1} parent=1 // pred_region
      %s838 = ssub.s32 1024, 1024
      %839 = vsyncadd [#allocation5], %s838
      %s840 = sshll.u32 [#allocation9], 4
      %s841 = int_to_ptr.vmem [resolvable:$true] %s840
      %846 = dma.vmem_to_hbm [thread:$0]  %s841, 1024, %s4, [#allocation5], 128, 128, 8
    $region37: #{tpu_custom_call.1} parent=1 // pred_fallthru
      _
    // Predicated region
    $region38: #{tpu_custom_call.1} parent=1 // pred_check
      _
    $region39: #{tpu_custom_call.1} parent=1 // pred_check_branch
      %848 = sbr.rel (0) target = $region41
    $region40: #{tpu_custom_call.1} parent=1 // pred_region
      %s850 = ssub.s32 128, 128
      %851 = vsyncadd [#allocation11], %s850
      %s853 = sshll.u32 [#allocation10], 4
      %s854 = int_to_ptr.vmem [resolvable:$true] %s853
      %856 = dma.vmem_to_hbm [thread:$0]  %s854, 128, %s5, [#allocation11]
    $region41: #{tpu_custom_call.1} parent=1 // pred_fallthru
      _
    // Predicated region
    $region42: #{tpu_custom_call.1} parent=1 // pred_check
      _
    $region43: #{tpu_custom_call.1} parent=1 // pred_check_branch
      %858 = sbr.rel (0) target = $region45
    $region44: #{tpu_custom_call.1} parent=1 // pred_region
      %859 = dma.done [#allocation5], 1024
    $region45: #{tpu_custom_call.1} parent=1 // pred_fallthru
      _
    // Predicated region
    $region46: #{tpu_custom_call.1} parent=1 // pred_check
      _
    $region47: #{tpu_custom_call.1} parent=1 // pred_check_branch
      %861 = sbr.rel (0) target = $region49
    $region48: #{tpu_custom_call.1} parent=1 // pred_region
      %862 = dma.done [#allocation11], 128
    $region49: #{tpu_custom_call.1} parent=1 // pred_fallthru
      _
    %863 = vsyncpa [#allocation4], 1
    %864 = vsyncpa [#allocation7], 1
    %865 = vsyncpa [#allocation5], 1
    %866 = vsyncpa [#allocation11], 1

</llo_original>
